<compile_context>
chip_gen: v6e
topology: v6e:2x2x1
jax: 0.10.0
libtpu: 0.0.40
codegen_flags: <defaults>
</compile_context>

<pallas_src>
import functools

import jax
import jax.numpy as jnp
from jax.experimental import pallas as pl
from jax.experimental.pallas import tpu as pltpu


_VMEM_BUDGET = 32 * 1024 * 1024   # keep kernel-resident buffers well under v7x's 64 MiB
_VMEM_LIMIT = 64 * 1024 * 1024    # scoped-VMEM limit handed to Mosaic


def _round_up(x, m):
    return (x + m - 1) // m * m


def _ffn_kernel(x_ref, w_ref, gamma_ref, beta_ref, o_ref, *, eps, n_true):
    # x_ref:     (tile_m, K)       input rows (caller dtype, e.g. bf16)
    # w_ref:     (K, N_pad)        weight, pre-transposed, lane-padded to 128
    # gamma_ref: (1, N_pad) f32    LayerNorm scale (0 in padded lanes)
    # beta_ref:  (1, N_pad) f32    LayerNorm shift (0 in padded lanes)
    # o_ref:     (tile_m, N_pad)   output tile (caller dtype)

    # Linear (no bias) on the MXU with f32 accumulation.
    y = jnp.dot(x_ref[...], w_ref[...], preferred_element_type=jnp.float32)

    # LayerNorm over the true out_features. Padded weight columns are zero so
    # they contribute nothing to either reduction. Single pass: sum + sum-sq,
    # biased variance, eps inside rsqrt (torch defaults). Math stays in f32.
    inv_n = 1.0 / n_true
    row_sum = jnp.sum(y, axis=-1, keepdims=True)
    row_sq = jnp.sum(y * y, axis=-1, keepdims=True)
    mean = row_sum * inv_n
    var = jnp.maximum(row_sq * inv_n - mean * mean, 0.0)
    inv_std = jax.lax.rsqrt(var + eps)                       # EUP slot
    normed = (y - mean) * inv_std * gamma_ref[...] + beta_ref[...]

    # ReLU + store. Padded lanes are exactly 0 (gamma = beta = 0 there).
    o_ref[...] = jnp.maximum(normed, 0.0).astype(o_ref.dtype)


def feed_forward(x, weight, gamma, beta, *, eps=1e-5, tile_m=256):
    """Fused Linear(no bias) -> LayerNorm -> ReLU.

    x:      (..., in_features), any float dtype (bf16 recommended for speed)
    weight: (out_features, in_features)   (torch nn.Linear layout)
    gamma, beta: (out_features,)          LayerNorm affine params
    """
    in_features = x.shape[-1]
    out_features = weight.shape[0]
    lead = x.shape[:-1]

    compute_dtype = x.dtype                 # keep caller dtype for x / w / out
    itemsize = jnp.dtype(compute_dtype).itemsize
    x2d = x.reshape(-1, in_features)
    m = x2d.shape[0]

    # Lane-dense output: pad N to a multiple of 128. Padded gamma/beta = 0.
    n_pad = _round_up(out_features, 128)
    w_t = weight.astype(compute_dtype).T                      # (K, N)
    gamma2 = gamma.reshape(1, out_features).astype(jnp.float32)
    beta2 = beta.reshape(1, out_features).astype(jnp.float32)
    if n_pad != out_features:
        pad_n = n_pad - out_features
        w_t = jnp.pad(w_t, ((0, 0), (0, pad_n)))
        gamma2 = jnp.pad(gamma2, ((0, 0), (0, pad_n)))
        beta2 = jnp.pad(beta2, ((0, 0), (0, pad_n)))

    # Pick tile_m: as large as requested, shrunk to (a) the padded row count
    # and (b) a VMEM budget accounting for double-buffered x / w / out tiles.
    def vmem_bytes(tm):
        return (2 * tm * in_features * itemsize          # x tiles (dbl buf)
                + 2 * in_features * n_pad * itemsize     # weight (dbl buf)
                + 2 * 2 * n_pad * 4                      # gamma / beta
                + 2 * tm * n_pad * itemsize)             # out tiles (dbl buf)

    tile_m = max(8, min(_round_up(tile_m, 8), _round_up(m, 8)))
    while tile_m > 8 and vmem_bytes(tile_m) > _VMEM_BUDGET:
        tile_m = max(8, (tile_m // 2) // 8 * 8)

    m_pad = _round_up(m, tile_m)
    if m_pad != m:
        x2d = jnp.pad(x2d, ((0, m_pad - m), (0, 0)))
    grid_m = m_pad // tile_m

    kernel = functools.partial(_ffn_kernel, eps=eps, n_true=out_features)

    cost = pl.CostEstimate(
        flops=2 * m_pad * in_features * n_pad,
        transcendentals=m_pad,
        bytes_accessed=(m_pad * in_features * itemsize
                        + in_features * n_pad * itemsize
                        + 2 * n_pad * 4
                        + m_pad * n_pad * itemsize),
    )

    out2d = pl.pallas_call(
        kernel,
        out_shape=jax.ShapeDtypeStruct((m_pad, n_pad), compute_dtype),
        grid_spec=pltpu.PrefetchScalarGridSpec(
            num_scalar_prefetch=0,
            grid=(grid_m,),
            in_specs=[
                pl.BlockSpec((tile_m, in_features), lambda i: (i, 0)),
                pl.BlockSpec((in_features, n_pad), lambda i: (0, 0)),
                pl.BlockSpec((1, n_pad), lambda i: (0, 0)),
                pl.BlockSpec((1, n_pad), lambda i: (0, 0)),
            ],
            out_specs=pl.BlockSpec((tile_m, n_pad), lambda i: (i, 0)),
        ),
        compiler_params=pltpu.CompilerParams(
            dimension_semantics=("parallel",),
            vmem_limit_bytes=_VMEM_LIMIT,
        ),
        cost_estimate=cost,
    )(x2d, w_t, gamma2, beta2)

    out2d = out2d[:m, :out_features]
    return out2d.reshape(*lead, out_features)


def _reference(x, weight, gamma, beta, eps=1e-5):
    y = jnp.einsum("...k,nk->...n", x, weight)
    mean = jnp.mean(y, axis=-1, keepdims=True)
    var = jnp.mean((y - mean) ** 2, axis=-1, keepdims=True)
    y = (y - mean) * jax.lax.rsqrt(var + eps) * gamma + beta
    return jnp.maximum(y, 0.0)


if __name__ == "__main__":
    key = jax.random.PRNGKey(0)
    batch, seq = 2, 8
    in_features, out_features = 32, 64

    k_x, k_w, k_odd = jax.random.split(key, 3)
    x = jax.random.normal(k_x, (batch, seq, in_features), dtype=jnp.float32)

    # kaiming_normal_ (fan_in mode, gain=sqrt(2)): std = sqrt(2 / in_features)
    w = jax.random.normal(k_w, (out_features, in_features), dtype=jnp.float32)
    w = w * jnp.sqrt(2.0 / in_features)

    # LayerNorm affine params at their torch defaults.
    gamma = jnp.ones((out_features,), dtype=jnp.float32)
    beta = jnp.zeros((out_features,), dtype=jnp.float32)

    # f32 path (tight check).
    out = jax.block_until_ready(feed_forward(x, w, gamma, beta))
    ref = _reference(x, w, gamma, beta)
    assert out.shape == (batch, seq, out_features)
    assert jnp.allclose(out, ref, atol=1e-4, rtol=1e-5), \
        float(jnp.max(jnp.abs(out - ref)))

    # bf16 path (halved HBM traffic, 2x MXU throughput); reference computed
    # from the bf16-rounded inputs, LayerNorm stays in f32 inside the kernel.
    x_bf = x.astype(jnp.bfloat16)
    w_bf = w.astype(jnp.bfloat16)
    out_bf = jax.block_until_ready(feed_forward(x_bf, w_bf, gamma, beta))
    ref_bf = _reference(x_bf.astype(jnp.float32), w_bf.astype(jnp.float32),
                        gamma, beta)
    assert out_bf.dtype == jnp.bfloat16
    assert jnp.allclose(out_bf.astype(jnp.float32), ref_bf, atol=5e-2, rtol=5e-2)

    # Odd row count exercises the pad/slice path (no divisibility assert).
    x_odd = jax.random.normal(k_odd, (3, 10, in_features), dtype=jnp.float32)
    out_odd = jax.block_until_ready(feed_forward(x_odd, w, gamma, beta))
    ref_odd = _reference(x_odd, w, gamma, beta)
    assert out_odd.shape == (3, 10, out_features)
    assert jnp.allclose(out_odd, ref_odd, atol=1e-4, rtol=1e-5)

    print("KERNEL_OK")
</pallas_src>

<mosaic_0001>
module attributes {stable_mosaic.version = 11 : i64} {
  func.func @_ffn_kernel(%arg0: i32, %arg1: memref<16x32xf32, #tpu.memory_space<vmem>>, %arg2: memref<32x128xf32, #tpu.memory_space<vmem>>, %arg3: memref<1x128xf32, #tpu.memory_space<vmem>>, %arg4: memref<1x128xf32, #tpu.memory_space<vmem>>, %arg5: memref<16x128xf32, #tpu.memory_space<vmem>>) attributes {dimension_semantics = [#tpu.dimension_semantics<parallel>], iteration_bounds = array<i64: 1>, scalar_prefetch = 0 : i64, scratch_operands = 0 : i64, tpu.core_type = #tpu.core_type<tc>, window_params = [{transform_indices = @transform_0, window_bounds = array<i64: 16, 32>}, {pipeline_mode = #tpu.pipeline_mode<synchronous>, transform_indices = @transform_1, window_bounds = array<i64: 32, 128>}, {pipeline_mode = #tpu.pipeline_mode<synchronous>, transform_indices = @transform_2, window_bounds = array<i64: 1, 128>}, {pipeline_mode = #tpu.pipeline_mode<synchronous>, transform_indices = @transform_3, window_bounds = array<i64: 1, 128>}, {transform_indices = @transform_4, window_bounds = array<i64: 16, 128>}]} {
    %c0 = arith.constant 0 : index
    %c0_0 = arith.constant 0 : index
    %0 = vector.load %arg1[%c0, %c0_0] : memref<16x32xf32, #tpu.memory_space<vmem>>, vector<16x32xf32>
    %c0_1 = arith.constant 0 : index
    %c0_2 = arith.constant 0 : index
    %1 = vector.load %arg2[%c0_1, %c0_2] : memref<32x128xf32, #tpu.memory_space<vmem>>, vector<32x128xf32>
    %cst = arith.constant dense<0.000000e+00> : vector<16x128xf32>
    %2 = tpu.matmul %0, %1, %cst {dimension_numbers = #tpu.dot_dimension_numbers<[1], [0], [0], [1], [0, 0, 1, 1], [], []>} : vector<16x32xf32>, vector<32x128xf32>, vector<16x128xf32> -> vector<16x128xf32>
    %cst_3 = arith.constant dense<0.000000e+00> : vector<16xf32>
    %3 = vector.multi_reduction <add>, %2, %cst_3 [1] : vector<16x128xf32> to vector<16xf32>
    %4 = vector.shape_cast %3 : vector<16xf32> to vector<16x1xf32>
    %5 = arith.mulf %2, %2 : vector<16x128xf32>
    %cst_4 = arith.constant dense<0.000000e+00> : vector<16xf32>
    %6 = vector.multi_reduction <add>, %5, %cst_4 [1] : vector<16x128xf32> to vector<16xf32>
    %7 = vector.shape_cast %6 : vector<16xf32> to vector<16x1xf32>
    %cst_5 = arith.constant 1.562500e-02 : f32
    %8 = vector.broadcast %cst_5 : f32 to vector<16x1xf32>
    %9 = arith.mulf %4, %8 : vector<16x1xf32>
    %cst_6 = arith.constant 1.562500e-02 : f32
    %10 = vector.broadcast %cst_6 : f32 to vector<16x1xf32>
    %11 = arith.mulf %7, %10 : vector<16x1xf32>
    %12 = arith.mulf %9, %9 : vector<16x1xf32>
    %13 = arith.subf %11, %12 : vector<16x1xf32>
    %cst_7 = arith.constant 0.000000e+00 : f32
    %14 = vector.broadcast %cst_7 : f32 to vector<16x1xf32>
    %15 = arith.maximumf %13, %14 : vector<16x1xf32>
    %cst_8 = arith.constant 9.99999974E-6 : f32
    %16 = vector.broadcast %cst_8 : f32 to vector<16x1xf32>
    %17 = arith.addf %15, %16 : vector<16x1xf32>
    %18 = math.rsqrt %17 : vector<16x1xf32>
    %19 = vector.broadcast %9 : vector<16x1xf32> to vector<16x128xf32>
    %20 = arith.subf %2, %19 : vector<16x128xf32>
    %21 = vector.broadcast %18 : vector<16x1xf32> to vector<16x128xf32>
    %22 = arith.mulf %20, %21 : vector<16x128xf32>
    %c0_9 = arith.constant 0 : index
    %c0_10 = arith.constant 0 : index
    %23 = vector.load %arg3[%c0_9, %c0_10] : memref<1x128xf32, #tpu.memory_space<vmem>>, vector<1x128xf32>
    %24 = vector.broadcast %23 : vector<1x128xf32> to vector<16x128xf32>
    %25 = arith.mulf %22, %24 : vector<16x128xf32>
    %c0_11 = arith.constant 0 : index
    %c0_12 = arith.constant 0 : index
    %26 = vector.load %arg4[%c0_11, %c0_12] : memref<1x128xf32, #tpu.memory_space<vmem>>, vector<1x128xf32>
    %27 = vector.broadcast %26 : vector<1x128xf32> to vector<16x128xf32>
    %28 = arith.addf %25, %27 : vector<16x128xf32>
    %cst_13 = arith.constant 0.000000e+00 : f32
    %29 = vector.broadcast %cst_13 : f32 to vector<16x128xf32>
    %30 = arith.maximumf %28, %29 : vector<16x128xf32>
    %c0_14 = arith.constant 0 : index
    %c0_15 = arith.constant 0 : index
    %31 = vector.load %arg5[%c0_14, %c0_15] : memref<16x128xf32, #tpu.memory_space<vmem>>, vector<16x128xf32>
    tpu.vector_store %arg5[%c0_14, %c0_15], %30 {strides = array<i32>} : memref<16x128xf32, #tpu.memory_space<vmem>>, vector<16x128xf32>,
    return
  }
  func.func @transform_0(%arg0: i32) -> (i32, i32) {
    %c0_i32 = arith.constant 0 : i32
    %c0_i32_0 = arith.constant 0 : i32
    return %arg0, %c0_i32 : i32, i32
  }
  func.func @transform_1(%arg0: i32) -> (i32, i32) {
    %c0_i32 = arith.constant 0 : i32
    %c0_i32_0 = arith.constant 0 : i32
    %c0_i32_1 = arith.constant 0 : i32
    return %c0_i32, %c0_i32_0 : i32, i32
  }
  func.func @transform_2(%arg0: i32) -> (i32, i32) {
    %c0_i32 = arith.constant 0 : i32
    %c0_i32_0 = arith.constant 0 : i32
    %c0_i32_1 = arith.constant 0 : i32
    return %c0_i32, %c0_i32_0 : i32, i32
  }
  func.func @transform_3(%arg0: i32) -> (i32, i32) {
    %c0_i32 = arith.constant 0 : i32
    %c0_i32_0 = arith.constant 0 : i32
    %c0_i32_1 = arith.constant 0 : i32
    return %c0_i32, %c0_i32_0 : i32, i32
  }
  func.func @transform_4(%arg0: i32) -> (i32, i32) {
    %c0_i32 = arith.constant 0 : i32
    %c0_i32_0 = arith.constant 0 : i32
    return %arg0, %c0_i32 : i32, i32
  }
}

</mosaic_0001>

<llo_original>
// kernel: tpu_custom_call.1
$region0: #{tpu_custom_call.1}
  #allocation0 [shape = 'u32[]', space=smem, size = 0x4, offset = 0x4, fixed_abs, tag = 'smem constant byte address 0x4 - core index']
  #allocation1 [shape = 'u32[144,128]{1,0:T(1,128)}', space=vmem, size = 0x12000, scoped, tag = 'internal scratch']
  %s0 = inlined_call_operand.hbm [shape: f32[16,32], index: 0, kind: input, shape index: {}]
  %s1 = inlined_call_operand.hbm [shape: f32[32,128], index: 1, kind: input, shape index: {}]
  %s2 = inlined_call_operand.vmem [shape: f32[1,128], index: 2, kind: input, shape index: {}]
  %s3 = inlined_call_operand.vmem [shape: f32[1,128], index: 3, kind: input, shape index: {}]
  %s4 = inlined_call_operand.hbm [shape: f32[16,128], index: 4, kind: output, shape index: {}]
  %s5 = sld [smem:[#allocation0]]
  $region34: #{tpu_custom_call.1} parent=0
    _
  %s7 = ssub.s32 1, %s5
  %s8 = scalar_select 0, %s7, %s5
  $region1: #{tpu_custom_call.1} parent=0
    #allocation2 [shape = 'u8[8192]{0}', space=vmem, size = 0x2000, scoped, tag = 'input window, operand 0, single buffered']
    #allocation3 [shape = 's32[1]{0}', space=sflag, size = 0x4, scoped, tag = 'scoped memory for tpu_custom_call.1']
    #allocation4 [shape = 's32[1]{0}', space=sflag, size = 0x4, scoped, tag = 'scoped memory for tpu_custom_call.1']
    #allocation5 [shape = 'u8[16384]{0}', space=vmem, size = 0x4000, scoped, tag = 'input window, operand 1, single buffered']
    #allocation6 [shape = 's32[1]{0}', space=sflag, size = 0x4, scoped, tag = 'scoped memory for tpu_custom_call.1']
    #allocation7 [shape = 'u8[8192]{0}', space=vmem, size = 0x2000, scoped, tag = 'output window, operand 0, single buffered']
    %9 = vsyncpa [#allocation3], 0
    %10 = vsyncpa [#allocation6], 0
    %11 = vsyncpa [#allocation4], 0
    // Predicated region
    $region2: #{tpu_custom_call.1} parent=1 // pred_check
      _
    $region3: #{tpu_custom_call.1} parent=1 // pred_check_branch
      %13 = sbr.rel (0) target = $region5
    $region4: #{tpu_custom_call.1} parent=1 // pred_region
      %s15 = ssub.s32 256, 256
      %16 = vsyncadd [#allocation3], %s15
      %s17 = sshll.u32 [#allocation2], 4
      %s18 = int_to_ptr.vmem [resolvable:$true] %s17
      %23 = dma.hbm_to_vmem [thread:$0]  %s0, 256, %s18, [#allocation3], 128, 128, 8
    $region5: #{tpu_custom_call.1} parent=1 // pred_fallthru
      _
    // Predicated region
    $region6: #{tpu_custom_call.1} parent=1 // pred_check
      _
    $region7: #{tpu_custom_call.1} parent=1 // pred_check_branch
      %25 = sbr.rel (0) target = $region9
    $region8: #{tpu_custom_call.1} parent=1 // pred_region
      %s27 = ssub.s32 512, 512
      %28 = vsyncadd [#allocation6], %s27
      %s29 = sshll.u32 [#allocation5], 4
      %s30 = int_to_ptr.vmem [resolvable:$true] %s29
      %35 = dma.hbm_to_vmem [thread:$0]  %s1, 512, %s30, [#allocation6], 128, 128, 8
    $region9: #{tpu_custom_call.1} parent=1 // pred_fallthru
      _
    // Predicated region
    $region10: #{tpu_custom_call.1} parent=1 // pred_check
      _
    $region11: #{tpu_custom_call.1} parent=1 // pred_check_branch
      %37 = sbr.rel (0) target = $region13
    $region12: #{tpu_custom_call.1} parent=1 // pred_region
      _
    $region13: #{tpu_custom_call.1} parent=1 // pred_fallthru
      _
    // Predicated region
    $region14: #{tpu_custom_call.1} parent=1 // pred_check
      _
    $region15: #{tpu_custom_call.1} parent=1 // pred_check_branch
      %39 = sbr.rel (0) target = $region17
    $region16: #{tpu_custom_call.1} parent=1 // pred_region
      _
    $region17: #{tpu_custom_call.1} parent=1 // pred_fallthru
      _
    // Predicated region
    $region18: #{tpu_custom_call.1} parent=1 // pred_check
      _
    $region19: #{tpu_custom_call.1} parent=1 // pred_check_branch
      %41 = sbr.rel (0) target = $region21
    $region20: #{tpu_custom_call.1} parent=1 // pred_region
      %42 = dma.done [#allocation3], 256
    $region21: #{tpu_custom_call.1} parent=1 // pred_fallthru
      _
    // Predicated region
    $region22: #{tpu_custom_call.1} parent=1 // pred_check
      _
    $region23: #{tpu_custom_call.1} parent=1 // pred_check_branch
      %44 = sbr.rel (0) target = $region25
    $region24: #{tpu_custom_call.1} parent=1 // pred_region
      %45 = dma.done [#allocation6], 512
    $region25: #{tpu_custom_call.1} parent=1 // pred_fallthru
      _
    %v46 = vld [vmem:[#allocation2] sm:$0xff]
    %v47 = vld [vmem:[#allocation2 + $0x8] sm:$0xff]
    %v48 = vld [vmem:[#allocation5] sm:$0xff]
    %v49 = vld [vmem:[#allocation5 + $0x8] sm:$0xff]
    %v50 = vld [vmem:[#allocation5 + $0x10] sm:$0xff]
    %v51 = vld [vmem:[#allocation5 + $0x18] sm:$0xff]
    %vm52 = vcmask 261120
    %v54 = vsel %vm52, %v46, 0
    %v57 = vsel %vm52, %v47, 0
    %59 = vmatprep.subr.mxu0 0.0
    %60 = vmatpush1.msra.mxu0 0.0
    %61 = vmatprep.subr.mxu0 0.0
    %62 = vmatpush1.msra.mxu0 0.0
    %63 = vmatprep.subr.mxu0 0.0
    %64 = vmatpush1.msra.mxu0 0.0
    %65 = vmatprep.subr.mxu0 0.0
    %66 = vmatpush1.msra.mxu0 0.0
    %67 = vmatprep.subr.mxu0 0.0
    %68 = vmatpush1.msra.mxu0 0.0
    %69 = vmatprep.subr.mxu0 0.0
    %70 = vmatpush1.msra.mxu0 0.0
    %71 = vmatprep.subr.mxu0 0.0
    %72 = vmatpush1.msra.mxu0 0.0
    %73 = vmatprep.subr.mxu0 0.0
    %74 = vmatpush1.msra.mxu0 0.0
    %75 = vmatprep.subr.mxu0 0.0
    %76 = vmatpush1.msra.mxu0 0.0
    %77 = vmatprep.subr.mxu0 0.0
    %78 = vmatpush1.msra.mxu0 0.0
    %79 = vmatprep.subr.mxu0 0.0
    %80 = vmatpush1.msra.mxu0 0.0
    %81 = vmatprep.subr.mxu0 0.0
    %82 = vmatpush1.msra.mxu0 0.0
    %83 = vmatprep.subr.mxu0 0.0
    %84 = vmatpush1.msra.mxu0 %v51
    %85 = vmatprep.subr.mxu0 0.0
    %86 = vmatpush1.msra.mxu0 %v50
    %87 = vmatprep.subr.mxu0 0.0
    %88 = vmatpush1.msra.mxu0 %v49
    %89 = vmatprep.subr.mxu0 0.0
    %90 = vmatpush1.msra.mxu0 %v48
    %91 = vmatprep.subr.mxu0 0.0
    %92 = vmatpush2.msra.mxu0 0.0
    %93 = vmatprep.subr.mxu0 0.0
    %94 = vmatpush2.msra.mxu0 0.0
    %95 = vmatprep.subr.mxu0 0.0
    %96 = vmatpush2.msra.mxu0 0.0
    %97 = vmatprep.subr.mxu0 0.0
    %98 = vmatpush2.msra.mxu0 0.0
    %99 = vmatprep.subr.mxu0 0.0
    %100 = vmatpush2.msra.mxu0 0.0
    %101 = vmatprep.subr.mxu0 0.0
    %102 = vmatpush2.msra.mxu0 0.0
    %103 = vmatprep.subr.mxu0 0.0
    %104 = vmatpush2.msra.mxu0 0.0
    %105 = vmatprep.subr.mxu0 0.0
    %106 = vmatpush2.msra.mxu0 0.0
    %107 = vmatprep.subr.mxu0 0.0
    %108 = vmatpush2.msra.mxu0 0.0
    %109 = vmatprep.subr.mxu0 0.0
    %110 = vmatpush2.msra.mxu0 0.0
    %111 = vmatprep.subr.mxu0 0.0
    %112 = vmatpush2.msra.mxu0 0.0
    %113 = vmatprep.subr.mxu0 0.0
    %114 = vmatpush2.msra.mxu0 0.0
    %115 = vmatprep.subr.mxu0 0.0
    %116 = vmatpush2.msra.mxu0 0.0
    %117 = vmatprep.subr.mxu0 0.0
    %118 = vmatpush2.msra.mxu0 0.0
    %119 = vmatprep.subr.mxu0 0.0
    %120 = vmatpush2.msra.mxu0 0.0
    %121 = vmatprep.subr.mxu0 0.0
    %122 = vmatpush2.msra.mxu0 0.0
    %123 = vmatprep.mubr.f32.mxu0 0.0
    %124 = vmatmul.mubr.f32.gmra.mxu0 %v54
    %v125 = vpop.f32.mrf.mxu0
    %v126 = vadd.f32 0.0, %v125
    %v127 = vpop.f32.mrf.mxu0
    %128 = vmatprep.mubr.f32.mxu0 0.0
    %129 = vmatmul.mubr.f32.gmra.mxu0 %v57
    %v130 = vpop.f32.mrf.mxu0
    %v131 = vadd.f32 0.0, %v130
    %v132 = vpop.f32.mrf.mxu0
    %133 = vdwg.mxu0
    %134 = vadd.xlane.f32.xlu0 %v126
    %v135 = vpop.xlane.xlu0 %134
    %136 = vadd.xlane.f32.xlu0 %v131
    %v137 = vpop.xlane.xlu0 %136
    %v138 = vmul.f32 %v126, %v126
    %v139 = vmul.f32 %v131, %v131
    %140 = vadd.xlane.f32.xlu0 %v138
    %v141 = vpop.xlane.xlu0 %140
    %142 = vadd.xlane.f32.xlu0 %v139
    %v143 = vpop.xlane.xlu0 %142
    %v144 = vmul.f32 %v135, 0.015625
    %v145 = vmul.f32 %v137, 0.015625
    %v146 = vmul.f32 %v141, 0.015625
    %v147 = vmul.f32 %v143, 0.015625
    %v148 = vmul.f32 %v144, %v144
    %v149 = vmul.f32 %v145, %v145
    %v150 = vsub.f32 %v146, %v148
    %v151 = vsub.f32 %v147, %v149
    %v152 = vmax.f32 %v150, 0.0
    %v153 = vmax.f32 %v151, 0.0
    %v154 = vadd.f32 %v152, 1e-05
    %v155 = vadd.f32 %v153, 1e-05
    %v156 = vrsqrt.pop %v154
    %v157 = vrsqrt.pop %v155
    %v158 = vsub.f32 %v126, %v144
    %v159 = vsub.f32 %v131, %v145
    %v160 = vmul.f32 %v158, %v156
    %v161 = vmul.f32 %v159, %v157
    %v162 = vld [vmem:[%s2] sm:$0x1]
    %v164 = vlaneseq
    %v165 = vshrl.u32 %v164, 7
    %v166 = vsub.s32 0, %v165
    %v167 = vrot.slane %v162, %v166
    %v169 = vmul.f32 %v160, %v167
    %v170 = vmul.f32 %v161, %v167
    %v171 = vld [vmem:[%s3] sm:$0x1]
    %v173 = vlaneseq
    %v174 = vshrl.u32 %v173, 7
    %v175 = vsub.s32 0, %v174
    %v176 = vrot.slane %v171, %v175
    %v178 = vadd.f32 %v169, %v176
    %v179 = vadd.f32 %v170, %v176
    %v180 = vmax.f32 %v178, 0.0
    %v181 = vmax.f32 %v179, 0.0
    %182 = vst [vmem:[#allocation7] sm:$0xff] %v180
    %183 = vst [vmem:[#allocation7 + $0x8] sm:$0xff] %v181
    // Predicated region
    $region26: #{tpu_custom_call.1} parent=1 // pred_check
      _
    $region27: #{tpu_custom_call.1} parent=1 // pred_check_branch
      %185 = sbr.rel (0) target = $region29
    $region28: #{tpu_custom_call.1} parent=1 // pred_region
      %s187 = ssub.s32 256, 256
      %188 = vsyncadd [#allocation4], %s187
      %s189 = sshll.u32 [#allocation7], 4
      %s190 = int_to_ptr.vmem [resolvable:$true] %s189
      %195 = dma.vmem_to_hbm [thread:$0]  %s190, 256, %s4, [#allocation4], 128, 128, 8
    $region29: #{tpu_custom_call.1} parent=1 // pred_fallthru
      _
    // Predicated region
    $region30: #{tpu_custom_call.1} parent=1 // pred_check
      _
    $region31: #{tpu_custom_call.1} parent=1 // pred_check_branch
      %197 = sbr.rel (0) target = $region33
    $region32: #{tpu_custom_call.1} parent=1 // pred_region
      %198 = dma.done [#allocation4], 256
    $region33: #{tpu_custom_call.1} parent=1 // pred_fallthru
      _
    %199 = vsyncpa [#allocation3], 1
    %200 = vsyncpa [#allocation6], 1
    %201 = vsyncpa [#allocation4], 1

</llo_original>
